<compile_context>
chip_gen: v6e
topology: v6e:2x2x1
jax: 0.10.0
libtpu: 0.0.40
codegen_flags: <defaults>
</compile_context>

<pallas_src>
import functools

import jax
import jax.numpy as jnp
import numpy as np
from jax.experimental import pallas as pl
from jax.experimental.pallas import tpu as pltpu


def _round_up(x, m):
    return ((x + m - 1) // m) * m


def _tpu_vmem_capacity_bytes():
    """Physical VMEM per core; conservative 64 MiB (v7x) if undetectable."""
    try:
        info = pltpu.get_tpu_info()
        for attr in ("vmem_capacity_bytes", "vmem_bytes", "vmem_capacity"):
            v = getattr(info, attr, None)
            if v:
                return int(v)
    except Exception:
        pass
    return 64 << 20


_VMEM_CAP = _tpu_vmem_capacity_bytes()
# Scoped-VMEM limit handed to Mosaic: ~3/4 of physical, capped at 96 MiB.
_VMEM_LIMIT = max(32 << 20, min((_VMEM_CAP * 3) // 4, 96 << 20))


def _fused_batch_tile(B, C, HW, x_itemsize, vmem_limit):
    """Largest divisor bt of B (keeping grid >= 2 when B >= 2 so both v7x
    TensorCores get work) whose fused working set fits VMEM; 0 => two-pass."""
    # live set per bt: 2 double-buffered x blocks + 2 out blocks + ~2 f32 temps
    per_bt = C * HW * (2 * x_itemsize + 4 * 4)
    budget = int(vmem_limit * 0.9)
    if per_bt > budget:
        return 0
    cap = B // 2 if B >= 2 else 1
    cap = max(1, min(cap, budget // per_bt, B))
    for cand in range(cap, 0, -1):
        if B % cand == 0:
            return cand
    return 1


def _pick_hw_tile(C, HW, budget):
    """Lane-aligned HW tile near the VMEM budget; prefers exact divisors of HW
    (no padding) but pads rather than collapsing to narrow 128-lane tiles."""
    hw128 = _round_up(HW, 128)
    cap = max(128, (budget // (C * 4)) // 128 * 128)
    if hw128 <= cap:
        return hw128
    if HW % 128 == 0:
        thw = cap
        while thw > 128 and HW % thw != 0:
            thw -= 128
        if thw >= cap // 2:
            return thw
    return cap


def _pick_batch_tile(B, C, thw, budget):
    """Pack batch elements per block up to the VMEM budget (amortizes the
    ~0.35us/grid-step overhead for small feature maps) while keeping the
    parallel grid >= 2 for v7x's two TensorCores."""
    cap = B // 2 if B >= 2 else 1
    cap = max(1, min(cap, max(1, budget // (C * thw * 4)), B))
    for cand in range(cap, 0, -1):
        if B % cand == 0:
            return cand
    return 1


# ---------------------------------------------------------------------------
# Kernels
# ---------------------------------------------------------------------------
def _fused_kernel(x_ref, w_ref, b_ref, o_ref, *, inv_hw):
    # x_ref: (bt, C, HW) | w_ref: (C, C) | b_ref: (C, 1) | o_ref: (bt, C, HW)
    x = x_ref[...].astype(jnp.float32)
    bt = x.shape[0]
    # adaptive average pool -> (bt, C, 1)
    avg = jnp.sum(x, axis=-1, keepdims=True) * inv_hw
    # 1x1 conv as one batched matmul; gate never leaves VMEM/vregs
    w = w_ref[...]
    w_b = jnp.broadcast_to(w, (bt,) + w.shape)                       # (bt, C, C)
    z = jnp.einsum("bij,bjl->bil", w_b, avg,
                   preferred_element_type=jnp.float32) + b_ref[...][None]
    gate = jax.nn.sigmoid(z)                                         # (bt, C, 1)
    gated = gate * x                                                 # channel attention
    spatial = jax.nn.sigmoid(jnp.mean(gated, axis=1, keepdims=True))  # (bt, 1, HW)
    o_ref[...] = (spatial * gated).astype(o_ref.dtype)               # spatial attention


def _pool_sum_kernel(x_ref, sum_ref):
    # x_ref: (bt, C, thw) | sum_ref: (bt, C, 1) resident accumulator over HW tiles
    @pl.when(pl.program_id(1) == 0)
    def _():
        sum_ref[...] = jnp.zeros_like(sum_ref)

    sum_ref[...] += jnp.sum(x_ref[...].astype(jnp.float32), axis=-1, keepdims=True)


def _apply_kernel(gate_ref, x_ref, o_ref):
    # gate_ref: (bt, C, 1) | x_ref, o_ref: (bt, C, thw)
    x = x_ref[...].astype(jnp.float32)
    gated = gate_ref[...] * x                                        # channel attention
    spatial = jax.nn.sigmoid(jnp.mean(gated, axis=1, keepdims=True))
    o_ref[...] = (spatial * gated).astype(o_ref.dtype)               # spatial attention


# ---------------------------------------------------------------------------
# Wrapper
# ---------------------------------------------------------------------------
def global_attention_block(x_nchw, conv_w, conv_b, *, tile_hw=None, batch_tile=None,
                           force_two_pass=False, stream_bf16=False):
    """x_nchw: (B, C, H, W); conv_w: (C, C, 1, 1) or (C, C); conv_b: (C,)."""
    B, C, H, W = x_nchw.shape
    HW = H * W
    inv_hw = 1.0 / float(HW)

    x_flat = jnp.asarray(x_nchw, jnp.float32).reshape(B, C, HW)
    w = jnp.asarray(conv_w, jnp.float32).reshape(C, C)
    b_col = jnp.asarray(conv_b, jnp.float32).reshape(C, 1)

    stream_dtype = jnp.bfloat16 if stream_bf16 else jnp.float32
    x_stream = x_flat.astype(stream_dtype)
    itemsize = jnp.dtype(stream_dtype).itemsize
    vmem_limit = _VMEM_LIMIT

    # ----------------- fused single-pass path (x read once, written once) ----
    if not force_two_pass and tile_hw is None and batch_tile is None:
        bt = _fused_batch_tile(B, C, HW, itemsize, vmem_limit)
        if bt:
            GB = B // bt
            out_flat = pl.pallas_call(
                functools.partial(_fused_kernel, inv_hw=inv_hw),
                out_shape=jax.ShapeDtypeStruct((B, C, HW), jnp.float32),
                grid_spec=pltpu.PrefetchScalarGridSpec(
                    num_scalar_prefetch=0,
                    grid=(GB,),
                    in_specs=[
                        pl.BlockSpec((bt, C, HW), lambda gb: (gb, 0, 0)),
                        pl.BlockSpec((C, C), lambda gb: (0, 0)),
                        pl.BlockSpec((C, 1), lambda gb: (0, 0)),
                    ],
                    out_specs=pl.BlockSpec((bt, C, HW), lambda gb: (gb, 0, 0)),
                ),
                compiler_params=pltpu.CompilerParams(
                    dimension_semantics=("parallel",),
                    vmem_limit_bytes=vmem_limit),
            )(x_stream, w, b_col)
            return out_flat.reshape(B, C, H, W)

    # ----------------- two-pass fallback (large C*HW slabs) ------------------
    block_budget = max(1 << 20, min(12 << 20, vmem_limit // 8))
    if tile_hw is not None:
        thw = min(max(128, _round_up(int(tile_hw), 128)), _round_up(HW, 128))
    else:
        thw = _pick_hw_tile(C, HW, block_budget)
    HW_pad = _round_up(HW, thw)
    T = HW_pad // thw
    if batch_tile is not None:
        bt = int(batch_tile)
        assert B % bt == 0, "batch_tile must divide B"
    else:
        bt = _pick_batch_tile(B, C, thw, block_budget)
    GB = B // bt

    if HW_pad != HW:
        # Zero padding keeps the pooled mean exact (we divide by the true HW);
        # padded output lanes are sliced off below.
        x_stream = jnp.pad(x_stream, ((0, 0), (0, 0), (0, HW_pad - HW)))

    # Pass 1: per-channel spatial sums (resident accumulator over the HW axis).
    sums = pl.pallas_call(
        _pool_sum_kernel,
        out_shape=jax.ShapeDtypeStruct((B, C, 1), jnp.float32),
        grid_spec=pltpu.PrefetchScalarGridSpec(
            num_scalar_prefetch=0,
            grid=(GB, T),
            in_specs=[pl.BlockSpec((bt, C, thw), lambda gb, t: (gb, 0, t))],
            out_specs=pl.BlockSpec((bt, C, 1), lambda gb, t: (gb, 0, 0)),
        ),
        compiler_params=pltpu.CompilerParams(
            dimension_semantics=("parallel", "arbitrary"),
            vmem_limit_bytes=vmem_limit),
    )(x_stream)

    # Tiny (B, C) 1x1 conv + sigmoid as plain XLA between the two passes, so
    # w/b never sit double-buffered in VMEM during the streaming passes.
    pooled = sums[:, :, 0] * inv_hw                                  # (B, C)
    gate = jax.nn.sigmoid(pooled @ w.T + jnp.reshape(b_col, (C,)))   # (B, C)
    gate3 = gate[:, :, None].astype(jnp.float32)                     # (B, C, 1)

    # Deeper input buffering hides DMA issue latency when tiles are narrow.
    x_spec = pl.BlockSpec((bt, C, thw), lambda gb, t: (gb, 0, t))
    if T >= 3 and thw <= 512:
        try:
            x_spec = pl.BlockSpec((bt, C, thw), lambda gb, t: (gb, 0, t),
                                  pipeline_mode=pl.Buffered(3))
        except Exception:
            pass  # keep the default double buffer if pipeline_mode unsupported

    # Pass 2: apply channel gate + spatial gate, fully parallel grid.
    out_flat = pl.pallas_call(
        _apply_kernel,
        out_shape=jax.ShapeDtypeStruct((B, C, HW_pad), jnp.float32),
        grid_spec=pltpu.PrefetchScalarGridSpec(
            num_scalar_prefetch=0,
            grid=(GB, T),
            in_specs=[
                pl.BlockSpec((bt, C, 1), lambda gb, t: (gb, 0, 0)),
                x_spec,
            ],
            out_specs=pl.BlockSpec((bt, C, thw), lambda gb, t: (gb, 0, t)),
        ),
        compiler_params=pltpu.CompilerParams(
            dimension_semantics=("parallel", "parallel"),
            vmem_limit_bytes=vmem_limit),
    )(gate3, x_stream)

    if HW_pad != HW:
        out_flat = out_flat[:, :, :HW]
    return out_flat.reshape(B, C, H, W)


def _reference(x, conv_w, conv_b):
    """Pure-JAX mirror of the PyTorch forward."""
    B, C, H, W = x.shape
    w = jnp.asarray(conv_w, jnp.float32).reshape(C, C)
    bias = jnp.asarray(conv_b, jnp.float32).reshape(C)
    pooled = jnp.mean(x.astype(jnp.float32), axis=(2, 3))     # AdaptiveAvgPool2d((1,1))
    gate = jax.nn.sigmoid(pooled @ w.T + bias)                # 1x1 conv + sigmoid
    out = gate[:, :, None, None] * x                          # channel attention
    spatial = jax.nn.sigmoid(jnp.mean(out, axis=1, keepdims=True))
    return spatial * out                                      # spatial attention


if __name__ == "__main__":
    key = jax.random.PRNGKey(0)
    kx1, kx2, kw, kb = jax.random.split(key, 4)

    B, C, H, W = 2, 4, 16, 16
    x1 = jax.random.normal(kx1, (B, C, H, W), dtype=jnp.float32)
    bound = 1.0 / np.sqrt(C)      # PyTorch Conv2d default init bound (fan_in = C*1*1)
    conv_w = jax.random.uniform(kw, (C, C, 1, 1), jnp.float32, -bound, bound)
    conv_b = jax.random.uniform(kb, (C,), jnp.float32, -bound, bound)
    ref1 = _reference(x1, conv_w, conv_b)

    # 1) fused single-pass path (default when the slab fits VMEM)
    out_fused = jax.block_until_ready(global_attention_block(x1, conv_w, conv_b))
    np.testing.assert_allclose(np.asarray(out_fused), np.asarray(ref1),
                               rtol=1e-5, atol=1e-5)

    # 2) two-pass fallback: resident channel-sum accumulator over HW tiles
    out_two = jax.block_until_ready(
        global_attention_block(x1, conv_w, conv_b, force_two_pass=True, tile_hw=128))
    np.testing.assert_allclose(np.asarray(out_two), np.asarray(ref1),
                               rtol=1e-5, atol=1e-5)

    # 3) two-pass fallback with H*W not a multiple of 128 (padding + Buffered(3))
    x2 = jax.random.normal(kx2, (2, 4, 18, 18), dtype=jnp.float32)
    ref2 = _reference(x2, conv_w, conv_b)
    out_pad = jax.block_until_ready(
        global_attention_block(x2, conv_w, conv_b, force_two_pass=True, tile_hw=128))
    np.testing.assert_allclose(np.asarray(out_pad), np.asarray(ref2),
                               rtol=1e-5, atol=1e-5)

    # 4) bf16 streaming mode (halves HBM bytes; arithmetic stays f32; not bit-exact)
    out_bf16 = jax.block_until_ready(
        global_attention_block(x1, conv_w, conv_b, stream_bf16=True))
    np.testing.assert_allclose(np.asarray(out_bf16), np.asarray(ref1),
                               rtol=2e-2, atol=2e-2)

    print("KERNEL_OK")
</pallas_src>

<mosaic_0001>
module attributes {stable_mosaic.version = 11 : i64} {
  func.func @_fused_kernel(%arg0: i32, %arg1: memref<1x4x256xf32, #tpu.memory_space<vmem>>, %arg2: memref<4x4xf32, #tpu.memory_space<vmem>>, %arg3: memref<4x1xf32, #tpu.memory_space<vmem>>, %arg4: memref<1x4x256xf32, #tpu.memory_space<vmem>>) attributes {dimension_semantics = [#tpu.dimension_semantics<parallel>], iteration_bounds = array<i64: 2>, scalar_prefetch = 0 : i64, scratch_operands = 0 : i64, tpu.core_type = #tpu.core_type<tc>, window_params = [{transform_indices = @transform_0, window_bounds = array<i64: 1, 4, 256>}, {pipeline_mode = #tpu.pipeline_mode<synchronous>, transform_indices = @transform_1, window_bounds = array<i64: 4, 4>}, {pipeline_mode = #tpu.pipeline_mode<synchronous>, transform_indices = @transform_2, window_bounds = array<i64: 4, 1>}, {transform_indices = @transform_3, window_bounds = array<i64: 1, 4, 256>}]} {
    %c0 = arith.constant 0 : index
    %c0_0 = arith.constant 0 : index
    %c0_1 = arith.constant 0 : index
    %0 = vector.load %arg1[%c0, %c0_0, %c0_1] : memref<1x4x256xf32, #tpu.memory_space<vmem>>, vector<1x4x256xf32>
    %cst = arith.constant dense<0.000000e+00> : vector<1x4xf32>
    %1 = vector.multi_reduction <add>, %0, %cst [2] : vector<1x4x256xf32> to vector<1x4xf32>
    %2 = vector.shape_cast %1 : vector<1x4xf32> to vector<1x4x1xf32>
    %cst_2 = arith.constant 3.906250e-03 : f32
    %3 = vector.broadcast %cst_2 : f32 to vector<1x4x1xf32>
    %4 = arith.mulf %2, %3 : vector<1x4x1xf32>
    %c0_3 = arith.constant 0 : index
    %c0_4 = arith.constant 0 : index
    %5 = vector.load %arg2[%c0_3, %c0_4] : memref<4x4xf32, #tpu.memory_space<vmem>>, vector<4x4xf32>
    %6 = vector.shape_cast %5 : vector<4x4xf32> to vector<1x4x4xf32>
    "tpu.trace_start"() <{level = 10 : i32, message = "bij,bjl->bil"}> : () -> ()
    %cst_5 = arith.constant dense<0.000000e+00> : vector<1x4x1xf32>
    %7 = tpu.matmul %6, %4, %cst_5 {dimension_numbers = #tpu.dot_dimension_numbers<[2], [1], [1], [2], [0, 0, 0, 1, 1, 2], [0], [0]>} : vector<1x4x4xf32>, vector<1x4x1xf32>, vector<1x4x1xf32> -> vector<1x4x1xf32>
    "tpu.trace_stop"() : () -> ()
    %c0_6 = arith.constant 0 : index
    %c0_7 = arith.constant 0 : index
    %8 = vector.load %arg3[%c0_6, %c0_7] : memref<4x1xf32, #tpu.memory_space<vmem>>, vector<4x1xf32>
    %9 = vector.shape_cast %8 : vector<4x1xf32> to vector<1x4x1xf32>
    %10 = arith.addf %7, %9 : vector<1x4x1xf32>
    %11 = arith.negf %10 : vector<1x4x1xf32>
    %12 = math.exp %11 : vector<1x4x1xf32>
    %cst_8 = arith.constant 1.000000e+00 : f32
    %13 = vector.broadcast %cst_8 : f32 to vector<1x4x1xf32>
    %14 = arith.addf %13, %12 : vector<1x4x1xf32>
    %15 = arith.divf %13, %14 : vector<1x4x1xf32>
    %16 = vector.broadcast %15 : vector<1x4x1xf32> to vector<1x4x256xf32>
    %17 = arith.mulf %16, %0 : vector<1x4x256xf32>
    %cst_9 = arith.constant dense<0.000000e+00> : vector<1x256xf32>
    %18 = vector.multi_reduction <add>, %17, %cst_9 [1] : vector<1x4x256xf32> to vector<1x256xf32>
    %19 = vector.shape_cast %18 : vector<1x256xf32> to vector<1x1x256xf32>
    %cst_10 = arith.constant 4.000000e+00 : f32
    %20 = vector.broadcast %cst_10 : f32 to vector<1x1x256xf32>
    %21 = arith.divf %19, %20 : vector<1x1x256xf32>
    %22 = arith.negf %21 : vector<1x1x256xf32>
    %23 = math.exp %22 : vector<1x1x256xf32>
    %cst_11 = arith.constant 1.000000e+00 : f32
    %24 = vector.broadcast %cst_11 : f32 to vector<1x1x256xf32>
    %25 = arith.addf %24, %23 : vector<1x1x256xf32>
    %26 = arith.divf %24, %25 : vector<1x1x256xf32>
    %27 = vector.broadcast %26 : vector<1x1x256xf32> to vector<1x4x256xf32>
    %28 = arith.mulf %27, %17 : vector<1x4x256xf32>
    %c0_12 = arith.constant 0 : index
    %c0_13 = arith.constant 0 : index
    %c0_14 = arith.constant 0 : index
    %29 = vector.load %arg4[%c0_12, %c0_13, %c0_14] : memref<1x4x256xf32, #tpu.memory_space<vmem>>, vector<1x4x256xf32>
    tpu.vector_store %arg4[%c0_12, %c0_13, %c0_14], %28 {strides = array<i32>} : memref<1x4x256xf32, #tpu.memory_space<vmem>>, vector<1x4x256xf32>,
    return
  }
  func.func @transform_0(%arg0: i32) -> (i32, i32, i32) {
    %c0_i32 = arith.constant 0 : i32
    %c0_i32_0 = arith.constant 0 : i32
    %c0_i32_1 = arith.constant 0 : i32
    return %arg0, %c0_i32, %c0_i32_0 : i32, i32, i32
  }
  func.func @transform_1(%arg0: i32) -> (i32, i32) {
    %c0_i32 = arith.constant 0 : i32
    %c0_i32_0 = arith.constant 0 : i32
    %c0_i32_1 = arith.constant 0 : i32
    return %c0_i32, %c0_i32_0 : i32, i32
  }
  func.func @transform_2(%arg0: i32) -> (i32, i32) {
    %c0_i32 = arith.constant 0 : i32
    %c0_i32_0 = arith.constant 0 : i32
    %c0_i32_1 = arith.constant 0 : i32
    return %c0_i32, %c0_i32_0 : i32, i32
  }
  func.func @transform_3(%arg0: i32) -> (i32, i32, i32) {
    %c0_i32 = arith.constant 0 : i32
    %c0_i32_0 = arith.constant 0 : i32
    %c0_i32_1 = arith.constant 0 : i32
    return %arg0, %c0_i32, %c0_i32_0 : i32, i32, i32
  }
}

</mosaic_0001>

<llo_original>
// kernel: tpu_custom_call.1
$region0: #{tpu_custom_call.1}
  #allocation0 [shape = 'u32[]', space=smem, size = 0x4, offset = 0x4, fixed_abs, tag = 'smem constant byte address 0x4 - core index']
  #allocation1 [shape = 'u32[144,128]{1,0:T(1,128)}', space=vmem, size = 0x12000, scoped, tag = 'internal scratch']
  %s0 = inlined_call_operand.hbm [shape: f32[2,4,256], index: 0, kind: input, shape index: {}]
  %s1 = inlined_call_operand.vmem [shape: f32[4,4], index: 1, kind: input, shape index: {}]
  %s2 = inlined_call_operand.vmem [shape: f32[4,1], index: 2, kind: input, shape index: {}]
  %s3 = inlined_call_operand.hbm [shape: f32[2,4,256], index: 3, kind: output, shape index: {}]
  %s4 = sld [smem:[#allocation0]]
  $region49: #{tpu_custom_call.1} parent=0
    _
  %s6 = ssub.s32 1, %s4
  %s7 = scalar_select 0, %s6, %s4
  $region1: #{tpu_custom_call.1} parent=0
    #allocation2 [shape = 'u8[8192]{0}', space=vmem, size = 0x2000, scoped, tag = 'input window, operand 0']
    #allocation3 [shape = 's32[2]{0}', space=sflag, size = 0x8, scoped, tag = 'scoped memory for tpu_custom_call.1']
    #allocation4 [shape = 's32[2]{0}', space=sflag, size = 0x8, scoped, tag = 'scoped memory for tpu_custom_call.1']
    #allocation5 [shape = 'u8[8192]{0}', space=vmem, size = 0x2000, scoped, tag = 'output window, operand 0']
    %8 = vsyncpa [#allocation3], 0
    %s9 = scalar_lea.sflag [#allocation3], 1
    %10 = vsyncpa %s9, 0
    %11 = vsyncpa [#allocation4], 0
    %s12 = scalar_lea.sflag [#allocation4], 1
    %13 = vsyncpa %s12, 0
    loop: start=0, step=1, limit=4
    $region2: #{tpu_custom_call.1} parent=1 // loop_pre_header
      _
    $region3: #{tpu_custom_call.1} parent=1 // loop_header
      %s15 = sphi 0, %s19
      %p16 = scmp.ge.s32.totalorder %s15, 4
      %s25 = sphi 0, %s27
      %s28 = sphi 0, %s25
      %s29 = sphi 0, %s28
      %s45 = sphi 0, %s29
      %s49 = sphi 0, %s49
      %s51 = sphi 0, %s49
      %s52 = sphi 0, %s51
      %s66 = sphi 0, %s52
      %s70 = sphi 0, %s70
      %s72 = sphi 0, %s70
      %s73 = sphi 0, %s72
      %s87 = sphi 0, %s73
      %s93 = sphi 0, %s95
      %s96 = sphi 0, %s93
      %s97 = sphi 0, %s96
      %s113 = sphi 0, %s97
    $region4: #{tpu_custom_call.1} parent=1 // loop_header_branch
      %18 = sbr.rel (%p16) target = $region8
    $region5: #{tpu_custom_call.1} parent=1 // loop_body
      %s20 = ssub.s32 %s15, 1
      %s21 = ssub.s32 %s15, 2
      %s22 = sadd.s32 %s15, 1
      %s23 = ssub.s32 %s15, %s22
      %p24 = scmp.eq.s32.totalorder %s23, 0
      %s26 = sadd.s32 %s25, 1
      %s27 = scalar_select %p24, %s25, %s26
      %p30 = pneg %p24
      %p31 = scmp.eq.s32.totalorder %s15, 1
      %p32 = por %p30, %p31
      %p33 = scmp.ne.s32.totalorder %s25, %s28
      %p34 = scmp.eq.s32.totalorder %s15, 0
      %p35 = por %p33, %p34
      %p36 = scmp.ne.s32.totalorder %s25, %s28
      %p37 = scmp.eq.s32.totalorder %s20, 1
      %p38 = por %p36, %p37
      %p39 = scmp.ne.s32.totalorder %s28, %s29
      %p40 = scmp.eq.s32.totalorder %s20, 0
      %p41 = por %p39, %p40
      %p42 = scmp.ne.s32.totalorder %s28, %s29
      %p43 = scmp.eq.s32.totalorder %s21, 1
      %p44 = por %p42, %p43
      %p46 = scmp.ne.s32.totalorder %s29, %s45
      %p47 = scmp.eq.s32.totalorder %s21, 0
      %p48 = por %p46, %p47
      %s50 = sadd.s32 %s49, 1
      %p53 = scmp.eq.s32.totalorder %s15, 1
      %p54 = scmp.ne.s32.totalorder %s49, %s51
      %p55 = scmp.eq.s32.totalorder %s15, 0
      %p56 = por %p54, %p55
      %p57 = scmp.ne.s32.totalorder %s49, %s51
      %p58 = scmp.eq.s32.totalorder %s20, 1
      %p59 = por %p57, %p58
      %p60 = scmp.ne.s32.totalorder %s51, %s52
      %p61 = scmp.eq.s32.totalorder %s20, 0
      %p62 = por %p60, %p61
      %p63 = scmp.ne.s32.totalorder %s51, %s52
      %p64 = scmp.eq.s32.totalorder %s21, 1
      %p65 = por %p63, %p64
      %p67 = scmp.ne.s32.totalorder %s52, %s66
      %p68 = scmp.eq.s32.totalorder %s21, 0
      %p69 = por %p67, %p68
      %s71 = sadd.s32 %s70, 1
      %p74 = scmp.eq.s32.totalorder %s15, 1
      %p75 = scmp.ne.s32.totalorder %s70, %s72
      %p76 = scmp.eq.s32.totalorder %s15, 0
      %p77 = por %p75, %p76
      %p78 = scmp.ne.s32.totalorder %s70, %s72
      %p79 = scmp.eq.s32.totalorder %s20, 1
      %p80 = por %p78, %p79
      %p81 = scmp.ne.s32.totalorder %s72, %s73
      %p82 = scmp.eq.s32.totalorder %s20, 0
      %p83 = por %p81, %p82
      %p84 = scmp.ne.s32.totalorder %s72, %s73
      %p85 = scmp.eq.s32.totalorder %s21, 1
      %p86 = por %p84, %p85
      %p88 = scmp.ne.s32.totalorder %s73, %s87
      %p89 = scmp.eq.s32.totalorder %s21, 0
      %p90 = por %p88, %p89
      %s91 = ssub.s32 %s15, %s22
      %p92 = scmp.eq.s32.totalorder %s91, 0
      %s94 = sadd.s32 %s93, 1
      %s95 = scalar_select %p92, %s93, %s94
      %p98 = pneg %p92
      %p99 = scmp.eq.s32.totalorder %s15, 1
      %p100 = por %p98, %p99
      %p101 = scmp.ne.s32.totalorder %s93, %s96
      %p102 = scmp.eq.s32.totalorder %s15, 0
      %p103 = por %p101, %p102
      %p104 = scmp.ne.s32.totalorder %s93, %s96
      %p105 = scmp.eq.s32.totalorder %s20, 1
      %p106 = por %p104, %p105
      %p107 = scmp.ne.s32.totalorder %s96, %s97
      %p108 = scmp.eq.s32.totalorder %s20, 0
      %p109 = por %p107, %p108
      %p110 = scmp.ne.s32.totalorder %s96, %s97
      %p111 = scmp.eq.s32.totalorder %s21, 1
      %p112 = por %p110, %p111
      %p114 = scmp.ne.s32.totalorder %s97, %s113
      %p115 = scmp.eq.s32.totalorder %s21, 0
      %p116 = por %p114, %p115
      %p117 = scmp.le.s32.totalorder 1, %s15
      %p118 = scmp.lt.s32.totalorder %s15, 3
      %p119 = pnand %p117, %p118
      %p120 = pneg %p119
      // Predicated region
      $region9: #{tpu_custom_call.1} parent=5 // pred_check
        _
      $region10: #{tpu_custom_call.1} parent=5 // pred_check_branch
        %122 = sbr.rel (%p119) target = $region12
      $region11: #{tpu_custom_call.1} parent=5 // pred_region
        %s123 = ssub.s32 %s15, 1
        // Predicated region
        $region13: #{tpu_custom_call.1} parent=11 // pred_check
          %p124 = pneg %p62
        $region14: #{tpu_custom_call.1} parent=11 // pred_check_branch
          %126 = sbr.rel (%p124) target = $region16
        $region15: #{tpu_custom_call.1} parent=11 // pred_region
          _
        $region16: #{tpu_custom_call.1} parent=11 // pred_fallthru
          _
        // Predicated region
        $region17: #{tpu_custom_call.1} parent=11 // pred_check
          %p127 = pneg %p83
        $region18: #{tpu_custom_call.1} parent=11 // pred_check_branch
          %129 = sbr.rel (%p127) target = $region20
        $region19: #{tpu_custom_call.1} parent=11 // pred_region
          _
        $region20: #{tpu_custom_call.1} parent=11 // pred_fallthru
          _
      $region12: #{tpu_custom_call.1} parent=5 // pred_fallthru
        _
      %p130 = scmp.lt.s32.totalorder %s15, 2
      // Predicated region
      $region21: #{tpu_custom_call.1} parent=5 // pred_check
        %p131 = pneg %p130
      $region22: #{tpu_custom_call.1} parent=5 // pred_check_branch
        %133 = sbr.rel (%p131) target = $region24
      $region23: #{tpu_custom_call.1} parent=5 // pred_region
        // Predicated region
        $region25: #{tpu_custom_call.1} parent=23 // pred_check
          %p134 = pneg %p35
        $region26: #{tpu_custom_call.1} parent=23 // pred_check_branch
          %136 = sbr.rel (%p134) target = $region28
        $region27: #{tpu_custom_call.1} parent=23 // pred_region
          %s137 = sand.u32 %s25, 1
          %s138 = scalar_lea.sflag [#allocation3], %s137
          %s139 = sand.u32 %s25, 1
          %s140 = smul.addr %s139, 8
          %s141 = scalar_lea.vmem [#allocation2], %s140
          %s143 = ssub.s32 128, 128
          %144 = vsyncadd %s138, %s143
          %s145 = smul.addr %s15, 2
          %s146 = smul.addr %s145, 64
          %s147 = scalar_lea.hbm %s0, %s146
          %s149 = sshll.u32 %s141, 4
          %s150 = int_to_ptr.vmem [resolvable:$true] %s149
          %152 = dma.hbm_to_vmem [thread:$0]  %s147, 128, %s150, %s138
        $region28: #{tpu_custom_call.1} parent=23 // pred_fallthru
          _
      $region24: #{tpu_custom_call.1} parent=5 // pred_fallthru
        _
      %p153 = scmp.le.s32.totalorder 1, %s15
      %p154 = scmp.lt.s32.totalorder %s15, 3
      %p155 = pnand %p153, %p154
      %p156 = pneg %p155
      // Predicated region
      $region29: #{tpu_custom_call.1} parent=5 // pred_check
        _
      $region30: #{tpu_custom_call.1} parent=5 // pred_check_branch
        %158 = sbr.rel (%p155) target = $region32
      $region31: #{tpu_custom_call.1} parent=5 // pred_region
        %s159 = ssub.s32 %s15, 1
        %s160 = sand.u32 %s28, 1
        %s161 = scalar_lea.sflag [#allocation3], %s160
        %s162 = sand.u32 %s28, 1
        %s163 = smul.addr %s162, 8
        %s164 = scalar_lea.vmem [#allocation2], %s163
        // Predicated region
        $region33: #{tpu_custom_call.1} parent=31 // pred_check
          %p165 = pneg %p41
        $region34: #{tpu_custom_call.1} parent=31 // pred_check_branch
          %167 = sbr.rel (%p165) target = $region36
        $region35: #{tpu_custom_call.1} parent=31 // pred_region
          %168 = dma.done %s161, 128
        $region36: #{tpu_custom_call.1} parent=31 // pred_fallthru
          _
        %s169 = sand.u32 %s28, 1
        %s170 = scalar_lea.sflag [#allocation3], %s169
        %s171 = sand.u32 %s28, 1
        %s172 = smul.addr %s171, 8
        %s173 = scalar_lea.vmem [#allocation2], %s172
        %p174 = pneg %p41
        %p175 = pneg %p38
        %p176 = pneg %p62
        %p177 = pneg %p59
        %p178 = pneg %p83
        %p179 = pneg %p80
        %p180 = pneg %p109
        %p181 = pneg %p106
        %s182 = sand.u32 %s96, 1
        %s183 = scalar_lea.sflag [#allocation4], %s182
        %s184 = sand.u32 %s96, 1
        %s185 = smul.addr %s184, 8
        %s186 = scalar_lea.vmem [#allocation5], %s185
        %v187 = vld [vmem:[%s164] sm:$0xff]
        %v189 = vcombine.high %v187, %v187
        %vm191 = vcmask 1043456
        %v192 = vsel %vm191, %v187, 0.0
        %v193 = vsel %vm191, %v189, 0.0
        %v194 = vadd.f32 %v192, %v193
        %195 = vadd.xlane.f32.xlu0 %v194
        %v196 = vpop.xlane.xlu0 %195
        %v197 = vmul.f32 %v196, 0.00390625
        %v198 = vld [vmem:[%s1] sm:$0xf]
        %v199 = vld [vmem:[%s2] sm:$0xf]
        %vm200 = vcmask 31744
        %v202 = vsel %vm200, %v198, 0
        %v205 = vsel %vm191, %v197, 0
        %207 = vmatprep.subr.mxu0 0.0
        %208 = vmatpush1.msra.mxu0 0.0
        %209 = vmatprep.subr.mxu0 0.0
        %210 = vmatpush1.msra.mxu0 0.0
        %211 = vmatprep.subr.mxu0 0.0
        %212 = vmatpush1.msra.mxu0 0.0
        %213 = vmatprep.subr.mxu0 0.0
        %214 = vmatpush1.msra.mxu0 0.0
        %215 = vmatprep.subr.mxu0 0.0
        %216 = vmatpush1.msra.mxu0 0.0
        %217 = vmatprep.subr.mxu0 0.0
        %218 = vmatpush1.msra.mxu0 0.0
        %219 = vmatprep.subr.mxu0 0.0
        %220 = vmatpush1.msra.mxu0 0.0
        %221 = vmatprep.subr.mxu0 0.0
        %222 = vmatpush1.msra.mxu0 0.0
        %223 = vmatprep.subr.mxu0 0.0
        %224 = vmatpush1.msra.mxu0 0.0
        %225 = vmatprep.subr.mxu0 0.0
        %226 = vmatpush1.msra.mxu0 0.0
        %227 = vmatprep.subr.mxu0 0.0
        %228 = vmatpush1.msra.mxu0 0.0
        %229 = vmatprep.subr.mxu0 0.0
        %230 = vmatpush1.msra.mxu0 0.0
        %231 = vmatprep.subr.mxu0 0.0
        %232 = vmatpush1.msra.mxu0 0.0
        %233 = vmatprep.subr.mxu0 0.0
        %234 = vmatpush1.msra.mxu0 0.0
        %235 = vmatprep.subr.mxu0 0.0
        %236 = vmatpush1.msra.mxu0 0.0
        %237 = vmatprep.subr.mxu0 0.0
        %238 = vmatpush1.msra.mxu0 %v205
        %239 = vmatprep.subr.mxu0 0.0
        %240 = vmatpush2.msra.mxu0 0.0
        %241 = vmatprep.subr.mxu0 0.0
        %242 = vmatpush2.msra.mxu0 0.0
        %243 = vmatprep.subr.mxu0 0.0
        %244 = vmatpush2.msra.mxu0 0.0
        %245 = vmatprep.subr.mxu0 0.0
        %246 = vmatpush2.msra.mxu0 0.0
        %247 = vmatprep.subr.mxu0 0.0
        %248 = vmatpush2.msra.mxu0 0.0
        %249 = vmatprep.subr.mxu0 0.0
        %250 = vmatpush2.msra.mxu0 0.0
        %251 = vmatprep.subr.mxu0 0.0
        %252 = vmatpush2.msra.mxu0 0.0
        %253 = vmatprep.subr.mxu0 0.0
        %254 = vmatpush2.msra.mxu0 0.0
        %255 = vmatprep.subr.mxu0 0.0
        %256 = vmatpush2.msra.mxu0 0.0
        %257 = vmatprep.subr.mxu0 0.0
        %258 = vmatpush2.msra.mxu0 0.0
        %259 = vmatprep.subr.mxu0 0.0
        %260 = vmatpush2.msra.mxu0 0.0
        %261 = vmatprep.subr.mxu0 0.0
        %262 = vmatpush2.msra.mxu0 0.0
        %263 = vmatprep.subr.mxu0 0.0
        %264 = vmatpush2.msra.mxu0 0.0
        %265 = vmatprep.subr.mxu0 0.0
        %266 = vmatpush2.msra.mxu0 0.0
        %267 = vmatprep.subr.mxu0 0.0
        %268 = vmatpush2.msra.mxu0 0.0
        %269 = vmatprep.subr.mxu0 0.0
        %270 = vmatpush2.msra.mxu0 0.0
        %271 = vmatprep.mubr.f32.mxu0 0.0
        %272 = vmatmul.mubr.f32.gmra.mxu0 %v202
        %v273 = vpop.f32.mrf.mxu0
        %v274 = vadd.f32 %v199, %v273
        %v275 = vpop.f32.mrf.mxu0
        %276 = vdwg.mxu0
        %v277 = vxor.u32 %v274, 2147483648
        %v278 = vmul.f32 %v277, 1.442695
        %v279 = vpow.pop %v278
        %v280 = vadd.f32 %v279, 1.0
        %v281 = vrcp.pop %v280
        %v282 = vmul.f32 1.0, %v281
        %284 = vset.pattern.permute.xlu0 0
        %285 = vperm.xlu0 %284, %v282
        %v286 = vpop.permute.xlu0 %285
        %v288 = vmul.f32 %v286, %v187
        %v289 = vmul.f32 %v286, %v189
        %v290 = vsel %vm191, %v288, 0.0
        %v291 = vrot.slane %v290, 4
        %v292 = vadd.f32 %v290, %v291
        %v293 = vrot.slane %v292, 2
        %v294 = vadd.f32 %v292, %v293
        %v295 = vrot.slane %v294, 1
        %v296 = vadd.f32 %v294, %v295
        %v297 = vsel %vm191, %v289, 0.0
        %v298 = vrot.slane %v297, 4
        %v299 = vadd.f32 %v297, %v298
        %v300 = vrot.slane %v299, 2
        %v301 = vadd.f32 %v299, %v300
        %v302 = vrot.slane %v301, 1
        %v303 = vadd.f32 %v301, %v302
        %v304 = vrcp.pop 4.0
        %v305 = vmul.f32 %v296, %v304
        %v306 = vmul.f32 %v303, %v304
        %v307 = vxor.u32 %v305, 2147483648
        %v308 = vxor.u32 %v306, 2147483648
        %v309 = vmul.f32 %v307, 1.442695
        %v310 = vpow.pop %v309
        %v311 = vmul.f32 %v308, 1.442695
        %v312 = vpow.pop %v311
        %v313 = vadd.f32 %v310, 1.0
        %v314 = vadd.f32 %v312, 1.0
        %v315 = vrcp.pop %v313
        %v316 = vmul.f32 1.0, %v315
        %v317 = vrcp.pop %v314
        %v318 = vmul.f32 1.0, %v317
        %v319 = vmul.f32 %v316, %v288
        %v320 = vmul.f32 %v318, %v289
        %v323 = vcombine.low %v319, %v320
        %325 = vst [vmem:[%s186] sm:$0xff] %v323
        %s326 = sand.u32 %s96, 1
        %s327 = scalar_lea.sflag [#allocation4], %s326
        %s328 = sand.u32 %s96, 1
        %s329 = smul.addr %s328, 8
        %s330 = scalar_lea.vmem [#allocation5], %s329
        // Predicated region
        $region37: #{tpu_custom_call.1} parent=31 // pred_check
          %p331 = pneg %p106
        $region38: #{tpu_custom_call.1} parent=31 // pred_check_branch
          %333 = sbr.rel (%p331) target = $region40
        $region39: #{tpu_custom_call.1} parent=31 // pred_region
          %s335 = ssub.s32 128, 128
          %336 = vsyncadd %s327, %s335
          %s337 = smul.addr %s20, 2
          %s338 = smul.addr %s337, 64
          %s339 = scalar_lea.hbm %s3, %s338
          %s341 = sshll.u32 %s330, 4
          %s342 = int_to_ptr.vmem [resolvable:$true] %s341
          %344 = dma.vmem_to_hbm [thread:$0]  %s342, 128, %s339, %s327
        $region40: #{tpu_custom_call.1} parent=31 // pred_fallthru
          _
      $region32: #{tpu_custom_call.1} parent=5 // pred_fallthru
        _
      %p345 = scmp.le.s32.totalorder 2, %s15
      // Predicated region
      $region41: #{tpu_custom_call.1} parent=5 // pred_check
        %p346 = pneg %p345
      $region42: #{tpu_custom_call.1} parent=5 // pred_check_branch
        %348 = sbr.rel (%p346) target = $region44
      $region43: #{tpu_custom_call.1} parent=5 // pred_region
        %s349 = ssub.s32 %s15, 2
        // Predicated region
        $region45: #{tpu_custom_call.1} parent=43 // pred_check
          %p350 = pneg %p112
        $region46: #{tpu_custom_call.1} parent=43 // pred_check_branch
          %352 = sbr.rel (%p350) target = $region48
        $region47: #{tpu_custom_call.1} parent=43 // pred_region
          %s353 = sand.u32 %s97, 1
          %s354 = scalar_lea.sflag [#allocation4], %s353
          %s355 = sand.u32 %s97, 1
          %s356 = smul.addr %s355, 8
          %s357 = scalar_lea.vmem [#allocation5], %s356
          %358 = dma.done %s354, 128
        $region48: #{tpu_custom_call.1} parent=43 // pred_fallthru
          _
      $region44: #{tpu_custom_call.1} parent=5 // pred_fallthru
        _
    $region6: #{tpu_custom_call.1} parent=1 // loop_footer
      %s19 = sadd.s32 1, %s15
    $region7: #{tpu_custom_call.1} parent=1 // loop_footer_branch
      %14 = sbr.rel target = $region3
    $region8: #{tpu_custom_call.1} parent=1 // loop_exit
      _
    %359 = vsyncpa [#allocation3], 1
    %s360 = scalar_lea.sflag [#allocation3], 1
    %361 = vsyncpa %s360, 1
    %362 = vsyncpa [#allocation4], 1
    %s363 = scalar_lea.sflag [#allocation4], 1
    %364 = vsyncpa %s363, 1

</llo_original>
